<compile_context>
chip_gen: v6e
topology: v6e:2x2x1
jax: 0.10.0
libtpu: 0.0.40
codegen_flags: <defaults>
</compile_context>

<pallas_src>
import functools

import jax
import jax.numpy as jnp
from jax.experimental import pallas as pl
from jax.experimental.pallas import tpu as pltpu


def _dist2simi_kernel(neg_scale_ref, x_ref, o_ref):
    """o = exp(neg_scale * relu(x)); neg_scale = -exp(weights), scalar in SMEM."""
    neg_scale = neg_scale_ref[0]                      # f32 scalar from SMEM
    x = x_ref[...].astype(jnp.float32)                # no-op for f32 inputs
    o_ref[...] = jnp.exp(neg_scale * jnp.maximum(x, 0.0)).astype(o_ref.dtype)


def _round_up(x, m):
    return ((x + m - 1) // m) * m


def _sublane_multiple(dtype):
    # sub-32-bit dtypes pack along sublanes: 8 rows f32, 16 bf16, 32 int8/fp8
    return {4: 8, 2: 16, 1: 32}.get(jnp.dtype(dtype).itemsize, 8)


@functools.partial(jax.jit, static_argnames=("max_block_bytes",))
def dist2simi_matrix_batch(x, weights, *, max_block_bytes=4 * 1024 * 1024):
    """Pallas equivalent of dist2SimiMatrix_batch.forward.

    x       : [bs, r, d] input
    weights : scalar parameter (= log(wei), as in the PyTorch module)
    returns : exp(-exp(weights) * relu(x)), same shape / dtype as x
    """
    bs, r, d = x.shape
    n = bs * r * d
    itemsize = jnp.dtype(x.dtype).itemsize
    sub = _sublane_multiple(x.dtype)

    neg_scale = (-jnp.exp(jnp.asarray(weights))).astype(jnp.float32).reshape(1)

    compiler_params = pltpu.CompilerParams(
        dimension_semantics=("parallel",),          # shard the single axis across TCs
        vmem_limit_bytes=32 * 1024 * 1024,          # 4 x 4 MiB buffers fits all gens
    )
    cost = pl.CostEstimate(
        flops=2 * n, transcendentals=n, bytes_accessed=2 * n * itemsize)

    # ---- lane-dense 2-D view of the contiguous buffer when the size allows ----------
    lane = None
    for cand in (2048, 1024, 512, 256, 128):
        if n % cand == 0:
            lane = cand
            break

    if lane is not None:
        rows = n // lane
        x2 = x.reshape(rows, lane)                  # contiguous reshape: free

        # Largest tile within the block-byte budget, rounded to the sublane multiple.
        target_rows = max(sub, (max_block_bytes // (lane * itemsize)) // sub * sub)
        # Keep >= ~8 grid steps when there is enough data (v7x megacore balance).
        cap = max(sub, _round_up(pl.cdiv(rows, 8), sub))
        block_rows = min(target_rows, cap)
        if rows < block_rows:
            block_rows = rows                       # tiny input: one full-extent block

        grid = (pl.cdiv(rows, block_rows),)         # no pad: last block is masked
        out = pl.pallas_call(
            _dist2simi_kernel,
            out_shape=jax.ShapeDtypeStruct((rows, lane), x.dtype),
            grid=grid,
            in_specs=[
                pl.BlockSpec(memory_space=pltpu.MemorySpace.SMEM),   # -exp(w) scalar
                pl.BlockSpec((block_rows, lane), lambda i: (i, 0)),  # input tile
            ],
            out_specs=pl.BlockSpec((block_rows, lane), lambda i: (i, 0)),
            compiler_params=compiler_params,
            cost_estimate=cost,
        )(neg_scale, x2)
    else:
        # n not a multiple of 128: flatten to 1-D so every block except the masked last
        # one is an unmasked multiple of sub*128 lanes (no per-tile partial vst, no pad).
        x1 = x.reshape(n)
        unit = sub * 128
        if n <= unit:
            block = n                               # full-extent block: always legal
        else:
            target = max(unit, (max_block_bytes // itemsize) // unit * unit)
            cap = max(unit, _round_up(pl.cdiv(n, 8), unit))
            block = min(target, cap)

        grid = (pl.cdiv(n, block),)
        out = pl.pallas_call(
            _dist2simi_kernel,
            out_shape=jax.ShapeDtypeStruct((n,), x.dtype),
            grid=grid,
            in_specs=[
                pl.BlockSpec(memory_space=pltpu.MemorySpace.SMEM),
                pl.BlockSpec((block,), lambda i: (i,)),
            ],
            out_specs=pl.BlockSpec((block,), lambda i: (i,)),
            compiler_params=compiler_params,
            cost_estimate=cost,
        )(neg_scale, x1)

    return out.reshape(bs, r, d)


if __name__ == "__main__":
    key = jax.random.PRNGKey(0)
    wei = 0.5
    weights = jnp.log(jnp.asarray([wei], dtype=jnp.float32))   # nn.Parameter(log(wei))

    def ref(x):
        return jnp.exp(-jnp.exp(weights[0]) * jnp.maximum(x, 0.0))

    # Main path: lane-dense 2-D view, single block.
    bs, r, d = 2, 8, 32
    x = jax.random.normal(key, (bs, r, d), dtype=jnp.float32)
    y = jax.block_until_ready(dist2simi_matrix_batch(x, weights))
    assert y.shape == (bs, r, d), f"bad output shape: {y.shape}"
    err = float(jnp.max(jnp.abs(y - ref(x))))
    assert err < 1e-5, f"max abs error too large: {err}"

    # Multi-block 2-D path with a masked (partial) last block, no pad.
    x_big = jax.random.normal(jax.random.PRNGKey(2), (2, 9, 1024), dtype=jnp.float32)
    y_big = jax.block_until_ready(dist2simi_matrix_batch(x_big, weights))
    err_big = float(jnp.max(jnp.abs(y_big - ref(x_big))))
    assert err_big < 1e-5, f"2-D masked-block path error too large: {err_big}"

    # Non-128-divisible fallback: 1-D lane-dense path, single full-extent block.
    x_odd = jax.random.normal(jax.random.PRNGKey(1), (2, 7, 33), dtype=jnp.float32)
    y_odd = jax.block_until_ready(dist2simi_matrix_batch(x_odd, weights))
    err_odd = float(jnp.max(jnp.abs(y_odd - ref(x_odd))))
    assert err_odd < 1e-5, f"1-D fallback path error too large: {err_odd}"

    # Non-128-divisible fallback with multiple 1-D blocks (masked final block).
    x_odd2 = jax.random.normal(jax.random.PRNGKey(3), (3, 11, 97), dtype=jnp.float32)
    y_odd2 = jax.block_until_ready(dist2simi_matrix_batch(x_odd2, weights))
    err_odd2 = float(jnp.max(jnp.abs(y_odd2 - ref(x_odd2))))
    assert err_odd2 < 1e-5, f"1-D multi-block path error too large: {err_odd2}"

    print("KERNEL_OK")
</pallas_src>

<mosaic_0001>
module attributes {stable_mosaic.version = 11 : i64} {
  func.func @_dist2simi_kernel(%arg0: i32, %arg1: memref<1xf32, #tpu.memory_space<smem>>, %arg2: memref<1x512xf32, #tpu.memory_space<vmem>>, %arg3: memref<1x512xf32, #tpu.memory_space<vmem>>) attributes {dimension_semantics = [#tpu.dimension_semantics<parallel>], iteration_bounds = array<i64: 1>, scalar_prefetch = 0 : i64, scratch_operands = 0 : i64, tpu.core_type = #tpu.core_type<tc>, window_params = [{transform_indices = @transform_0, window_bounds = array<i64: 1>}, {transform_indices = @transform_1, window_bounds = array<i64: 1, 512>}, {transform_indices = @transform_2, window_bounds = array<i64: 1, 512>}]} {
    %c0 = arith.constant 0 : index
    %0 = memref.load %arg1[%c0] : memref<1xf32, #tpu.memory_space<smem>>
    %c0_0 = arith.constant 0 : index
    %c0_1 = arith.constant 0 : index
    %1 = vector.load %arg2[%c0_0, %c0_1] : memref<1x512xf32, #tpu.memory_space<vmem>>, vector<1x512xf32>
    %cst = arith.constant 0.000000e+00 : f32
    %2 = vector.broadcast %cst : f32 to vector<1x512xf32>
    %3 = arith.maximumf %1, %2 : vector<1x512xf32>
    %4 = vector.broadcast %0 : f32 to vector<1x512xf32>
    %5 = arith.mulf %4, %3 : vector<1x512xf32>
    %6 = math.exp %5 : vector<1x512xf32>
    %c0_2 = arith.constant 0 : index
    %c0_3 = arith.constant 0 : index
    %7 = vector.load %arg3[%c0_2, %c0_3] : memref<1x512xf32, #tpu.memory_space<vmem>>, vector<1x512xf32>
    tpu.vector_store %arg3[%c0_2, %c0_3], %6 {strides = array<i32>} : memref<1x512xf32, #tpu.memory_space<vmem>>, vector<1x512xf32>,
    return
  }
  func.func @transform_0(%arg0: i32) -> i32 {
    %c0_i32 = arith.constant 0 : i32
    %c0_i32_0 = arith.constant 0 : i32
    return %c0_i32 : i32
  }
  func.func @transform_1(%arg0: i32) -> (i32, i32) {
    %c0_i32 = arith.constant 0 : i32
    %c0_i32_0 = arith.constant 0 : i32
    return %arg0, %c0_i32 : i32, i32
  }
  func.func @transform_2(%arg0: i32) -> (i32, i32) {
    %c0_i32 = arith.constant 0 : i32
    %c0_i32_0 = arith.constant 0 : i32
    return %arg0, %c0_i32 : i32, i32
  }
}

</mosaic_0001>

<llo_original>
// kernel: dist2simi_matrix_batch.1
$region0: #{dist2simi_matrix_batch.1}
  #allocation0 [shape = 'u32[]', space=smem, size = 0x4, offset = 0x4, fixed_abs, tag = 'smem constant byte address 0x4 - core index']
  #allocation1 [shape = 'u32[144,128]{1,0:T(1,128)}', space=vmem, size = 0x12000, scoped, tag = 'internal scratch']
  #allocation2 [shape = 'f32[1]{0:T(128)S(6)}', space=smem, size = 0x200, scoped, tag = 'scoped memory for dist2simi_matrix_batch.1']
  %s0 = inlined_call_operand.<no memory space> [shape: f32[1], index: 0, kind: input, shape index: {}]
  %s1 = inlined_call_operand.vmem [shape: f32[1,512], index: 1, kind: input, shape index: {}]
  %s2 = inlined_call_operand.vmem [shape: f32[1,512], index: 2, kind: output, shape index: {}]
  %s3 = sld [smem:[#allocation0]]
  $region18: #{dist2simi_matrix_batch.1} parent=0
    _
  %s5 = ssub.s32 1, %s3
  %s6 = scalar_select 0, %s5, %s3
  %7 = sst [smem:[#allocation2]] %s0
  // Predicated region
  $region2: #{dist2simi_matrix_batch.1} parent=0 // pred_check
    _
  $region3: #{dist2simi_matrix_batch.1} parent=0 // pred_check_branch
    %9 = sbr.rel (0) target = $region5
  $region4: #{dist2simi_matrix_batch.1} parent=0 // pred_region
    _
  $region5: #{dist2simi_matrix_batch.1} parent=0 // pred_fallthru
    _
  // Predicated region
  $region6: #{dist2simi_matrix_batch.1} parent=0 // pred_check
    _
  $region7: #{dist2simi_matrix_batch.1} parent=0 // pred_check_branch
    %11 = sbr.rel (0) target = $region9
  $region8: #{dist2simi_matrix_batch.1} parent=0 // pred_region
    _
  $region9: #{dist2simi_matrix_batch.1} parent=0 // pred_fallthru
    _
  %s12 = sld [smem:[#allocation2]]
  %v13 = vld [vmem:[%s1] sm:$0xf]
  %v14 = vmax.f32 %v13, 0.0
  %v15 = vstv %s12
  %v16 = vmul.f32 %v15, %v14
  %v17 = vmul.f32 %v16, 1.442695
  %v18 = vpow.pop %v17
  %v19 = vlaneseq
  %vm20 = vcmp.ge.s32.totalorder %v19, 0
  %vm21 = vcmp.lt.s32.totalorder %v19, 512
  %vm22 = vmand %vm20, %vm21
  %23 = vst.msk [vmem:[%s2] sm:$0xf] %vm22, %v18
  // Predicated region
  $region10: #{dist2simi_matrix_batch.1} parent=0 // pred_check
    _
  $region11: #{dist2simi_matrix_batch.1} parent=0 // pred_check_branch
    %25 = sbr.rel (0) target = $region13
  $region12: #{dist2simi_matrix_batch.1} parent=0 // pred_region
    _
  $region13: #{dist2simi_matrix_batch.1} parent=0 // pred_fallthru
    _
  // Predicated region
  $region14: #{dist2simi_matrix_batch.1} parent=0 // pred_check
    _
  $region15: #{dist2simi_matrix_batch.1} parent=0 // pred_check_branch
    %27 = sbr.rel (0) target = $region17
  $region16: #{dist2simi_matrix_batch.1} parent=0 // pred_region
    _
  $region17: #{dist2simi_matrix_batch.1} parent=0 // pred_fallthru
    _

</llo_original>
